<compile_context>
chip_gen: v5e
topology: v5e:2x2
jax: 0.10.0
libtpu: 0.0.40
codegen_flags: <defaults>
</compile_context>

<pallas_src>
import itertools

import jax
import jax.numpy as jnp
import numpy as np
from jax import lax
from jax.experimental import pallas as pl
from jax.experimental.pallas import tpu as pltpu


def _upsample_subpixel_kernel(x_ref, w_ref, b_ref, o_ref):
    """One (n, d) output plane (one column tile) of the 27-tap sub-pixel GEMM.

    x_ref: (H+2, Wp+2, 3*C)  f32   haloed plane, channels = depth taps x C
    w_ref: (27*C, tn)        bf16  rows ordered (b, c, a, ci)
    b_ref: (1, tn)           f32
    o_ref: (H*Wp, tn)        f32   columns ordered (rd, rh, rw, co)
    """
    hp2, wp2, c3 = x_ref.shape
    h, wp = hp2 - 2, wp2 - 2
    tn = o_ref.shape[-1]

    acc = jnp.zeros((h * wp, tn), jnp.float32)
    for s, (b, c) in enumerate(itertools.product(range(3), range(3))):
        slab = x_ref[pl.ds(b, h), pl.ds(c, wp), :]          # (h, wp, 3C) f32
        slab = slab.reshape(h * wp, c3).astype(jnp.bfloat16)
        acc = acc + jnp.dot(slab, w_ref[pl.ds(s * c3, c3), :],
                            preferred_element_type=jnp.float32)
    o_ref[...] = (acc + b_ref[...]).astype(o_ref.dtype)


def _subpixel_weight(w):
    """(Cin, Cout, 4,4,4) ConvTranspose3d weight -> (27*Cin, 8*Cout) GEMM weight.

    Row order:  (a_h, a_w, a_d, ci)  -- in-plane taps outer, depth tap inner,
                matching the kernel's tap loop and the depth-concat channels.
    Col order:  (r_d, r_h, r_w, co)  -- output sub-pixel parity, then channel.
    For stride 2 / pad 1 / kernel 4: parity r at neighbourhood offset a uses
    kernel tap k = 3 + r - 2a (valid iff 0 <= a - r <= 1).
    """
    cin, cout = w.shape[0], w.shape[1]
    S = np.zeros((3, 2, 4), dtype=np.float32)
    for a in range(3):
        for r in range(2):
            k = 3 + r - 2 * a
            if 0 <= a - r <= 1 and 0 <= k <= 3:
                S[a, r, k] = 1.0
    S = jnp.asarray(S, dtype=w.dtype)
    # u=a_h, m=a_w, p=a_d, i=ci, q=r_d, v=r_h, n=r_w, o=co
    wbig = jnp.einsum('iodhw,pqd,uvh,mnw->umpiqvno', w, S, S, S)
    return wbig.reshape(27 * cin, 8 * cout)


def _pick_col_tile(nc, k_rows, m_rows):
    """Largest 128-multiple divisor of nc (or nc itself) fitting a VMEM budget."""
    budget = 24 * 1024 * 1024

    def blk_bytes(t):  # double-buffered bf16 weight block + f32 output block
        return 2 * (k_rows * t * 2) + 2 * (m_rows * t * 4)

    if blk_bytes(nc) <= budget:
        return nc
    for t in (2048, 1024, 512, 384, 256, 128):
        if t < nc and nc % t == 0 and blk_bytes(t) <= budget:
            return t
    return 128 if nc % 128 == 0 else nc


def upsample_conv_transpose3d(x, w, bias):
    """Forward of nn.ConvTranspose3d(dim, dim, 4, stride=2, padding=1).

    x: (N, C, D, H, W) f32,  w: (Cin, Cout, 4, 4, 4),  bias: (Cout,)
    returns (N, Cout, 2D, 2H, 2W) f32
    """
    n, c, d, h, wdt = x.shape
    cin, cout, kd, kh, kw = w.shape
    assert (kd, kh, kw) == (4, 4, 4) and cin == c

    # Keep the in-kernel (H, Wp) -> H*Wp collapse sublane-aligned (f32 tile = 8).
    wp = ((wdt + 7) // 8) * 8

    # Channels-last, one-voxel halo pad (+ alignment pad on W, cropped later).
    xcl = jnp.transpose(x, (0, 2, 3, 4, 1)).astype(jnp.float32)      # NDHWC
    xpad = jnp.pad(xcl, ((0, 0), (1, 1), (1, 1), (1, 1 + wp - wdt), (0, 0)))
    # Fold the 3 depth taps into channels: (N, D, H+2, Wp+2, 3*C).
    x3 = jnp.concatenate([xpad[:, 0:d], xpad[:, 1:d + 1], xpad[:, 2:d + 2]],
                         axis=-1)

    w_mat = _subpixel_weight(w).astype(jnp.bfloat16)                 # (27C, 8Cout)
    nc = 8 * cout
    bias_big = jnp.tile(bias.astype(jnp.float32), 8).reshape(1, nc)

    tn = _pick_col_tile(nc, 27 * c, h * wp)
    nj = nc // tn

    out = pl.pallas_call(
        _upsample_subpixel_kernel,
        out_shape=jax.ShapeDtypeStruct((n, d, h * wp, nc), jnp.float32),
        grid_spec=pltpu.PrefetchScalarGridSpec(
            num_scalar_prefetch=0,
            # Column-tile axis outermost so the weight block stays VMEM-resident
            # across all (n, d) planes of a given tile.
            grid=(nj, n, d),
            in_specs=[
                pl.BlockSpec((None, None, h + 2, wp + 2, 3 * c),
                             lambda j, ni, di: (ni, di, 0, 0, 0)),
                pl.BlockSpec((27 * c, tn), lambda j, ni, di: (0, j)),
                pl.BlockSpec((1, tn), lambda j, ni, di: (0, j)),
            ],
            out_specs=pl.BlockSpec((None, None, h * wp, tn),
                                   lambda j, ni, di: (ni, di, 0, j)),
        ),
        compiler_params=pltpu.CompilerParams(
            dimension_semantics=("parallel", "parallel", "parallel"),
            vmem_limit_bytes=64 * 1024 * 1024,
        ),
    )(x3, w_mat, bias_big)

    # Depth-to-space back to PyTorch NCDHW (drop the W alignment pad).
    # TODO(synk): a channels-last consumer could take (N, D, H, 2,2,2*?, Cout)
    # directly and skip this transpose; very large H*W planes would also want
    # an H-tile grid axis with a manual halo DMA (memory_space=pl.ANY).
    out = out.reshape(n, d, h, wp, 2, 2, 2, cout)[:, :, :, :wdt]
    out = out.transpose(0, 7, 1, 4, 2, 5, 3, 6)      # (N, Cout, D,2, H,2, W,2)
    return out.reshape(n, cout, 2 * d, 2 * h, 2 * wdt)


def _reference(x, w, bias):
    """XLA f32 reference: same transpose-conv semantics via conv_general_dilated."""
    cout = w.shape[1]
    w_corr = jnp.transpose(w[:, :, ::-1, ::-1, ::-1], (1, 0, 2, 3, 4))
    out = lax.conv_general_dilated(
        x, w_corr,
        window_strides=(1, 1, 1),
        padding=((2, 2), (2, 2), (2, 2)),
        lhs_dilation=(2, 2, 2),
        rhs_dilation=(1, 1, 1),
        dimension_numbers=("NCDHW", "OIDHW", "NCDHW"),
    )
    return out + bias.reshape(1, cout, 1, 1, 1)


if __name__ == "__main__":
    # small shapes: batch=2, dim=4, spatial D=H=W=8  -> output (2, 4, 16, 16, 16)
    N, dim, D, H, W = 2, 4, 8, 8, 8
    key = jax.random.PRNGKey(0)
    kx, kw, kb = jax.random.split(key, 3)

    x = jax.random.normal(kx, (N, dim, D, H, W), dtype=jnp.float32)

    # deterministic parameter init (PyTorch-style uniform bound)
    fan_in = dim * 4 * 4 * 4
    bound = 1.0 / np.sqrt(fan_in)
    w = jax.random.uniform(kw, (dim, dim, 4, 4, 4), jnp.float32, -bound, bound)
    b = jax.random.uniform(kb, (dim,), jnp.float32, -bound, bound)

    fwd = jax.jit(upsample_conv_transpose3d)
    out = jax.block_until_ready(fwd(x, w, b))
    assert out.shape == (N, dim, 2 * D, 2 * H, 2 * W), out.shape

    ref = jax.block_until_ready(_reference(x, w, b))
    # bf16 MXU operands (f32 accumulation) -> slightly looser tolerance.
    np.testing.assert_allclose(np.asarray(out), np.asarray(ref),
                               rtol=2e-2, atol=2e-2)
    print("KERNEL_OK")
</pallas_src>

<mosaic_0001>
module attributes {stable_mosaic.version = 11 : i64} {
  func.func @_upsample_subpixel_kernel(%arg0: i32, %arg1: i32, %arg2: i32, %arg3: memref<1x1x10x10x12xf32, #tpu.memory_space<vmem>>, %arg4: memref<108x32xbf16, #tpu.memory_space<vmem>>, %arg5: memref<1x32xf32, #tpu.memory_space<vmem>>, %arg6: memref<1x1x64x32xf32, #tpu.memory_space<vmem>>) attributes {dimension_semantics = [#tpu.dimension_semantics<parallel>, #tpu.dimension_semantics<parallel>, #tpu.dimension_semantics<parallel>], iteration_bounds = array<i64: 1, 2, 8>, scalar_prefetch = 0 : i64, scratch_operands = 0 : i64, tpu.core_type = #tpu.core_type<tc>, window_params = [{transform_indices = @transform_0, window_bounds = array<i64: 1, 1, 10, 10, 12>}, {transform_indices = @transform_1, window_bounds = array<i64: 108, 32>}, {transform_indices = @transform_2, window_bounds = array<i64: 1, 32>}, {transform_indices = @transform_3, window_bounds = array<i64: 1, 1, 64, 32>}]} {
    %cst = arith.constant 0.000000e+00 : f32
    %0 = vector.broadcast %cst : f32 to vector<64x32xf32>
    %c0 = arith.constant 0 : index
    %c0_0 = arith.constant 0 : index
    %c0_1 = arith.constant 0 : index
    %c0_2 = arith.constant 0 : index
    %c0_3 = arith.constant 0 : index
    %1 = vector.load %arg3[%c0, %c0_0, %c0_1, %c0_2, %c0_3] : memref<1x1x10x10x12xf32, #tpu.memory_space<vmem>>, vector<1x1x8x8x12xf32>
    %2 = vector.shape_cast %1 : vector<1x1x8x8x12xf32> to vector<8x8x12xf32>
    %3 = vector.shape_cast %2 : vector<8x8x12xf32> to vector<64x12xf32>
    %4 = arith.truncf %3 : vector<64x12xf32> to vector<64x12xbf16>
    %c0_4 = arith.constant 0 : index
    %c0_5 = arith.constant 0 : index
    %5 = vector.load %arg4[%c0_4, %c0_5] : memref<108x32xbf16, #tpu.memory_space<vmem>>, vector<12x32xbf16>
    %cst_6 = arith.constant dense<0.000000e+00> : vector<64x32xf32>
    %6 = tpu.matmul %4, %5, %cst_6 {dimension_numbers = #tpu.dot_dimension_numbers<[1], [0], [0], [1], [0, 0, 1, 1], [], []>} : vector<64x12xbf16>, vector<12x32xbf16>, vector<64x32xf32> -> vector<64x32xf32>
    %7 = arith.addf %0, %6 : vector<64x32xf32>
    %c0_7 = arith.constant 0 : index
    %c0_8 = arith.constant 0 : index
    %c0_9 = arith.constant 0 : index
    %c1 = arith.constant 1 : index
    %c0_10 = arith.constant 0 : index
    %8 = vector.load %arg3[%c0_7, %c0_8, %c0_9, %c1, %c0_10] : memref<1x1x10x10x12xf32, #tpu.memory_space<vmem>>, vector<1x1x8x8x12xf32>
    %9 = vector.shape_cast %8 : vector<1x1x8x8x12xf32> to vector<8x8x12xf32>
    %10 = vector.shape_cast %9 : vector<8x8x12xf32> to vector<64x12xf32>
    %11 = arith.truncf %10 : vector<64x12xf32> to vector<64x12xbf16>
    %c12 = arith.constant 12 : index
    %c0_11 = arith.constant 0 : index
    %12 = vector.load %arg4[%c12, %c0_11] : memref<108x32xbf16, #tpu.memory_space<vmem>>, vector<12x32xbf16>
    %cst_12 = arith.constant dense<0.000000e+00> : vector<64x32xf32>
    %13 = tpu.matmul %11, %12, %cst_12 {dimension_numbers = #tpu.dot_dimension_numbers<[1], [0], [0], [1], [0, 0, 1, 1], [], []>} : vector<64x12xbf16>, vector<12x32xbf16>, vector<64x32xf32> -> vector<64x32xf32>
    %14 = arith.addf %7, %13 : vector<64x32xf32>
    %c0_13 = arith.constant 0 : index
    %c0_14 = arith.constant 0 : index
    %c0_15 = arith.constant 0 : index
    %c2 = arith.constant 2 : index
    %c0_16 = arith.constant 0 : index
    %15 = vector.load %arg3[%c0_13, %c0_14, %c0_15, %c2, %c0_16] : memref<1x1x10x10x12xf32, #tpu.memory_space<vmem>>, vector<1x1x8x8x12xf32>
    %16 = vector.shape_cast %15 : vector<1x1x8x8x12xf32> to vector<8x8x12xf32>
    %17 = vector.shape_cast %16 : vector<8x8x12xf32> to vector<64x12xf32>
    %18 = arith.truncf %17 : vector<64x12xf32> to vector<64x12xbf16>
    %c24 = arith.constant 24 : index
    %c0_17 = arith.constant 0 : index
    %19 = vector.load %arg4[%c24, %c0_17] : memref<108x32xbf16, #tpu.memory_space<vmem>>, vector<12x32xbf16>
    %cst_18 = arith.constant dense<0.000000e+00> : vector<64x32xf32>
    %20 = tpu.matmul %18, %19, %cst_18 {dimension_numbers = #tpu.dot_dimension_numbers<[1], [0], [0], [1], [0, 0, 1, 1], [], []>} : vector<64x12xbf16>, vector<12x32xbf16>, vector<64x32xf32> -> vector<64x32xf32>
    %21 = arith.addf %14, %20 : vector<64x32xf32>
    %c0_19 = arith.constant 0 : index
    %c0_20 = arith.constant 0 : index
    %c1_21 = arith.constant 1 : index
    %c0_22 = arith.constant 0 : index
    %c0_23 = arith.constant 0 : index
    %22 = vector.load %arg3[%c0_19, %c0_20, %c1_21, %c0_22, %c0_23] : memref<1x1x10x10x12xf32, #tpu.memory_space<vmem>>, vector<1x1x8x8x12xf32>
    %23 = vector.shape_cast %22 : vector<1x1x8x8x12xf32> to vector<8x8x12xf32>
    %24 = vector.shape_cast %23 : vector<8x8x12xf32> to vector<64x12xf32>
    %25 = arith.truncf %24 : vector<64x12xf32> to vector<64x12xbf16>
    %c36 = arith.constant 36 : index
    %c0_24 = arith.constant 0 : index
    %26 = vector.load %arg4[%c36, %c0_24] : memref<108x32xbf16, #tpu.memory_space<vmem>>, vector<12x32xbf16>
    %cst_25 = arith.constant dense<0.000000e+00> : vector<64x32xf32>
    %27 = tpu.matmul %25, %26, %cst_25 {dimension_numbers = #tpu.dot_dimension_numbers<[1], [0], [0], [1], [0, 0, 1, 1], [], []>} : vector<64x12xbf16>, vector<12x32xbf16>, vector<64x32xf32> -> vector<64x32xf32>
    %28 = arith.addf %21, %27 : vector<64x32xf32>
    %c0_26 = arith.constant 0 : index
    %c0_27 = arith.constant 0 : index
    %c1_28 = arith.constant 1 : index
    %c1_29 = arith.constant 1 : index
    %c0_30 = arith.constant 0 : index
    %29 = vector.load %arg3[%c0_26, %c0_27, %c1_28, %c1_29, %c0_30] : memref<1x1x10x10x12xf32, #tpu.memory_space<vmem>>, vector<1x1x8x8x12xf32>
    %30 = vector.shape_cast %29 : vector<1x1x8x8x12xf32> to vector<8x8x12xf32>
    %31 = vector.shape_cast %30 : vector<8x8x12xf32> to vector<64x12xf32>
    %32 = arith.truncf %31 : vector<64x12xf32> to vector<64x12xbf16>
    %c48 = arith.constant 48 : index
    %c0_31 = arith.constant 0 : index
    %33 = vector.load %arg4[%c48, %c0_31] : memref<108x32xbf16, #tpu.memory_space<vmem>>, vector<12x32xbf16>
    %cst_32 = arith.constant dense<0.000000e+00> : vector<64x32xf32>
    %34 = tpu.matmul %32, %33, %cst_32 {dimension_numbers = #tpu.dot_dimension_numbers<[1], [0], [0], [1], [0, 0, 1, 1], [], []>} : vector<64x12xbf16>, vector<12x32xbf16>, vector<64x32xf32> -> vector<64x32xf32>
    %35 = arith.addf %28, %34 : vector<64x32xf32>
    %c0_33 = arith.constant 0 : index
    %c0_34 = arith.constant 0 : index
    %c1_35 = arith.constant 1 : index
    %c2_36 = arith.constant 2 : index
    %c0_37 = arith.constant 0 : index
    %36 = vector.load %arg3[%c0_33, %c0_34, %c1_35, %c2_36, %c0_37] : memref<1x1x10x10x12xf32, #tpu.memory_space<vmem>>, vector<1x1x8x8x12xf32>
    %37 = vector.shape_cast %36 : vector<1x1x8x8x12xf32> to vector<8x8x12xf32>
    %38 = vector.shape_cast %37 : vector<8x8x12xf32> to vector<64x12xf32>
    %39 = arith.truncf %38 : vector<64x12xf32> to vector<64x12xbf16>
    %c60 = arith.constant 60 : index
    %c0_38 = arith.constant 0 : index
    %40 = vector.load %arg4[%c60, %c0_38] : memref<108x32xbf16, #tpu.memory_space<vmem>>, vector<12x32xbf16>
    %cst_39 = arith.constant dense<0.000000e+00> : vector<64x32xf32>
    %41 = tpu.matmul %39, %40, %cst_39 {dimension_numbers = #tpu.dot_dimension_numbers<[1], [0], [0], [1], [0, 0, 1, 1], [], []>} : vector<64x12xbf16>, vector<12x32xbf16>, vector<64x32xf32> -> vector<64x32xf32>
    %42 = arith.addf %35, %41 : vector<64x32xf32>
    %c0_40 = arith.constant 0 : index
    %c0_41 = arith.constant 0 : index
    %c2_42 = arith.constant 2 : index
    %c0_43 = arith.constant 0 : index
    %c0_44 = arith.constant 0 : index
    %43 = vector.load %arg3[%c0_40, %c0_41, %c2_42, %c0_43, %c0_44] : memref<1x1x10x10x12xf32, #tpu.memory_space<vmem>>, vector<1x1x8x8x12xf32>
    %44 = vector.shape_cast %43 : vector<1x1x8x8x12xf32> to vector<8x8x12xf32>
    %45 = vector.shape_cast %44 : vector<8x8x12xf32> to vector<64x12xf32>
    %46 = arith.truncf %45 : vector<64x12xf32> to vector<64x12xbf16>
    %c72 = arith.constant 72 : index
    %c0_45 = arith.constant 0 : index
    %47 = vector.load %arg4[%c72, %c0_45] : memref<108x32xbf16, #tpu.memory_space<vmem>>, vector<12x32xbf16>
    %cst_46 = arith.constant dense<0.000000e+00> : vector<64x32xf32>
    %48 = tpu.matmul %46, %47, %cst_46 {dimension_numbers = #tpu.dot_dimension_numbers<[1], [0], [0], [1], [0, 0, 1, 1], [], []>} : vector<64x12xbf16>, vector<12x32xbf16>, vector<64x32xf32> -> vector<64x32xf32>
    %49 = arith.addf %42, %48 : vector<64x32xf32>
    %c0_47 = arith.constant 0 : index
    %c0_48 = arith.constant 0 : index
    %c2_49 = arith.constant 2 : index
    %c1_50 = arith.constant 1 : index
    %c0_51 = arith.constant 0 : index
    %50 = vector.load %arg3[%c0_47, %c0_48, %c2_49, %c1_50, %c0_51] : memref<1x1x10x10x12xf32, #tpu.memory_space<vmem>>, vector<1x1x8x8x12xf32>
    %51 = vector.shape_cast %50 : vector<1x1x8x8x12xf32> to vector<8x8x12xf32>
    %52 = vector.shape_cast %51 : vector<8x8x12xf32> to vector<64x12xf32>
    %53 = arith.truncf %52 : vector<64x12xf32> to vector<64x12xbf16>
    %c84 = arith.constant 84 : index
    %c0_52 = arith.constant 0 : index
    %54 = vector.load %arg4[%c84, %c0_52] : memref<108x32xbf16, #tpu.memory_space<vmem>>, vector<12x32xbf16>
    %cst_53 = arith.constant dense<0.000000e+00> : vector<64x32xf32>
    %55 = tpu.matmul %53, %54, %cst_53 {dimension_numbers = #tpu.dot_dimension_numbers<[1], [0], [0], [1], [0, 0, 1, 1], [], []>} : vector<64x12xbf16>, vector<12x32xbf16>, vector<64x32xf32> -> vector<64x32xf32>
    %56 = arith.addf %49, %55 : vector<64x32xf32>
    %c0_54 = arith.constant 0 : index
    %c0_55 = arith.constant 0 : index
    %c2_56 = arith.constant 2 : index
    %c2_57 = arith.constant 2 : index
    %c0_58 = arith.constant 0 : index
    %57 = vector.load %arg3[%c0_54, %c0_55, %c2_56, %c2_57, %c0_58] : memref<1x1x10x10x12xf32, #tpu.memory_space<vmem>>, vector<1x1x8x8x12xf32>
    %58 = vector.shape_cast %57 : vector<1x1x8x8x12xf32> to vector<8x8x12xf32>
    %59 = vector.shape_cast %58 : vector<8x8x12xf32> to vector<64x12xf32>
    %60 = arith.truncf %59 : vector<64x12xf32> to vector<64x12xbf16>
    %c96 = arith.constant 96 : index
    %c0_59 = arith.constant 0 : index
    %61 = vector.load %arg4[%c96, %c0_59] : memref<108x32xbf16, #tpu.memory_space<vmem>>, vector<12x32xbf16>
    %cst_60 = arith.constant dense<0.000000e+00> : vector<64x32xf32>
    %62 = tpu.matmul %60, %61, %cst_60 {dimension_numbers = #tpu.dot_dimension_numbers<[1], [0], [0], [1], [0, 0, 1, 1], [], []>} : vector<64x12xbf16>, vector<12x32xbf16>, vector<64x32xf32> -> vector<64x32xf32>
    %63 = arith.addf %56, %62 : vector<64x32xf32>
    %c0_61 = arith.constant 0 : index
    %c0_62 = arith.constant 0 : index
    %64 = vector.load %arg5[%c0_61, %c0_62] : memref<1x32xf32, #tpu.memory_space<vmem>>, vector<1x32xf32>
    %65 = vector.broadcast %64 : vector<1x32xf32> to vector<64x32xf32>
    %66 = arith.addf %63, %65 : vector<64x32xf32>
    %c0_63 = arith.constant 0 : index
    %c0_64 = arith.constant 0 : index
    %c0_65 = arith.constant 0 : index
    %c0_66 = arith.constant 0 : index
    %67 = vector.load %arg6[%c0_63, %c0_64, %c0_65, %c0_66] : memref<1x1x64x32xf32, #tpu.memory_space<vmem>>, vector<1x1x64x32xf32>
    %68 = vector.shape_cast %67 : vector<1x1x64x32xf32> to vector<64x32xf32>
    %69 = vector.shape_cast %66 : vector<64x32xf32> to vector<1x1x64x32xf32>
    tpu.vector_store %arg6[%c0_63, %c0_64, %c0_65, %c0_66], %69 {strides = array<i32>} : memref<1x1x64x32xf32, #tpu.memory_space<vmem>>, vector<1x1x64x32xf32>,
    return
  }
  func.func @transform_0(%arg0: i32, %arg1: i32, %arg2: i32) -> (i32, i32, i32, i32, i32) {
    %c0_i32 = arith.constant 0 : i32
    %c0_i32_0 = arith.constant 0 : i32
    %c0_i32_1 = arith.constant 0 : i32
    %c0_i32_2 = arith.constant 0 : i32
    return %arg1, %arg2, %c0_i32, %c0_i32_0, %c0_i32_1 : i32, i32, i32, i32, i32
  }
  func.func @transform_1(%arg0: i32, %arg1: i32, %arg2: i32) -> (i32, i32) {
    %c0_i32 = arith.constant 0 : i32
    %c0_i32_0 = arith.constant 0 : i32
    return %c0_i32, %arg0 : i32, i32
  }
  func.func @transform_2(%arg0: i32, %arg1: i32, %arg2: i32) -> (i32, i32) {
    %c0_i32 = arith.constant 0 : i32
    %c0_i32_0 = arith.constant 0 : i32
    return %c0_i32, %arg0 : i32, i32
  }
  func.func @transform_3(%arg0: i32, %arg1: i32, %arg2: i32) -> (i32, i32, i32, i32) {
    %c0_i32 = arith.constant 0 : i32
    %c0_i32_0 = arith.constant 0 : i32
    return %arg1, %arg2, %c0_i32, %arg0 : i32, i32, i32, i32
  }
}

</mosaic_0001>

<llo_original>
// kernel: tile.9
$region0: #{tile.9}
  %s0 = inlined_call_operand.vmem [shape: f32[8,4], index: 0, kind: input, shape index: {}]
  %s1 = inlined_call_operand.vmem [shape: f32[1,32], index: 1, kind: output, shape index: {}]
  $region1: #{tile.9} parent=0
    #allocation0 [shape = 'u8[4096]{0}', space=vmem, size = 0x1000, scoped, tag = 'scoped mem for output reshape']
    %v2 = vld [vmem:[%s0] sm:$0x1]
    %vm3 = vcmask 31744
    %4 = vst.msk [vmem:[#allocation0] sm:$0x1] %vm3, %v2
    %s5 = scalar_lea.vmem %s0, 7
    %v6 = vld [vmem:[%s5] sm:$0x1]
    %7 = vrot.lane.b32.xlu0 %v6, 28
    %v8 = vpop.permute.xlu0 %7
    %vm9 = vcmask 261344
    %10 = vst.msk [vmem:[#allocation0] sm:$0x1] %vm9, %v8
    %s11 = scalar_lea.vmem %s0, 6
    %v12 = vld [vmem:[%s11] sm:$0x1]
    %13 = vrot.lane.b32.xlu0 %v12, 24
    %v14 = vpop.permute.xlu0 %13
    %vm15 = vcmask 228544
    %16 = vst.msk [vmem:[#allocation0] sm:$0x1] %vm15, %v14
    %s17 = scalar_lea.vmem %s0, 5
    %v18 = vld [vmem:[%s17] sm:$0x1]
    %19 = vrot.lane.b32.xlu0 %v18, 20
    %v20 = vpop.permute.xlu0 %19
    %vm21 = vcmask 195744
    %22 = vst.msk [vmem:[#allocation0] sm:$0x1] %vm21, %v20
    %s23 = scalar_lea.vmem %s0, 4
    %v24 = vld [vmem:[%s23] sm:$0x1]
    %25 = vrot.lane.b32.xlu0 %v24, 16
    %v26 = vpop.permute.xlu0 %25
    %vm27 = vcmask 162944
    %28 = vst.msk [vmem:[#allocation0] sm:$0x1] %vm27, %v26
    %s29 = scalar_lea.vmem %s0, 3
    %v30 = vld [vmem:[%s29] sm:$0x1]
    %31 = vrot.lane.b32.xlu0 %v30, 12
    %v32 = vpop.permute.xlu0 %31
    %vm33 = vcmask 130144
    %34 = vst.msk [vmem:[#allocation0] sm:$0x1] %vm33, %v32
    %s35 = scalar_lea.vmem %s0, 2
    %v36 = vld [vmem:[%s35] sm:$0x1]
    %37 = vrot.lane.b32.xlu0 %v36, 8
    %v38 = vpop.permute.xlu0 %37
    %vm39 = vcmask 97344
    %40 = vst.msk [vmem:[#allocation0] sm:$0x1] %vm39, %v38
    %s41 = scalar_lea.vmem %s0, 1
    %v42 = vld [vmem:[%s41] sm:$0x1]
    %43 = vrot.lane.b32.xlu0 %v42, 4
    %v44 = vpop.permute.xlu0 %43
    %vm45 = vcmask 64544
    %46 = vst.msk [vmem:[#allocation0] sm:$0x1] %vm45, %v44
    %s48 = ssub.s32 2, 1
    %v49 = vld [vmem:[#allocation0] sm:%s48]
    %s51 = ssub.s32 2, 1
    %52 = vst [vmem:[%s1] sm:%s51] %v49

// kernel: tile.8
$region0: #{tile.8}
  #allocation2 [shape = 's32[1]{0}', space=sflag, size = 0x4, scoped, tag = 'scoped memory for tile.8']
  %s0 = inlined_call_operand.hbm [shape: f32[4], index: 0, kind: input, shape index: {}]
  %s1 = inlined_call_operand.vmem [shape: f32[8,4], index: 1, kind: output, shape index: {}]
  $region1: #{tile.8} parent=0
    #allocation0 [shape = 'u8[512]{0}', space=vmem, size = 0x400, scoped, tag = 'operand span for operand 0']
    #allocation1 [shape = 's32[1]{0}', space=sflag, size = 0x4, scoped, tag = 'scoped memory for tile.8']
    %2 = vsyncpa [#allocation1], 0
    // Predicated region
    $region2: #{tile.8} parent=1 // pred_check
      _
    $region3: #{tile.8} parent=1 // pred_check_branch
      %4 = sbr.rel (0) target = $region5
    $region4: #{tile.8} parent=1 // pred_region
      %6 = vsyncadd [#allocation1], 0
      %s8 = sshll.u32 %s0, 4
      %s9 = int_to_ptr.hbm [resolvable:$true] %s8
      %s10 = sshll.u32 [#allocation0], 4
      %s11 = int_to_ptr.vmem [resolvable:$true] %s10
      %13 = dma.hbm_to_vmem [thread:$0]  %s9, 16, %s11, [#allocation1]
    $region5: #{tile.8} parent=1 // pred_fallthru
      _
    // Predicated region
    $region6: #{tile.8} parent=1 // pred_check
      _
    $region7: #{tile.8} parent=1 // pred_check_branch
      %15 = sbr.rel (0) target = $region9
    $region8: #{tile.8} parent=1 // pred_region
      %17 = dma.done [#allocation1], 16
    $region9: #{tile.8} parent=1 // pred_fallthru
      _
    %v18 = vld [vmem:[#allocation0] ss:$0 sm:$0xff]
    %19 = vst [vmem:[%s1] sm:$0xff] %v18
    %20 = vsyncpa [#allocation1], 1

// kernel: upsample_conv_transpose3d.1
$region0: #{upsample_conv_transpose3d.1}
  #allocation0 [shape = 'u32[]', space=smem, size = 0x4, offset = 0x4, fixed_abs, tag = 'smem constant byte address 0x4 - core index']
  #allocation1 [shape = 'u32[72,128]{1,0:T(1,128)}', space=vmem, size = 0x9000, scoped, tag = 'internal scratch']
  %s0 = inlined_call_operand.vmem [shape: f32[2,8,10,10,12], index: 0, kind: input, shape index: {}]
  %s1 = inlined_call_operand.vmem [shape: bf16[108,32], index: 1, kind: input, shape index: {}]
  %s2 = inlined_call_operand.vmem [shape: f32[1,32], index: 2, kind: input, shape index: {}]
  %s3 = inlined_call_operand.vmem [shape: f32[2,8,64,32], index: 3, kind: output, shape index: {}]
  %s4 = sld [smem:[#allocation0]]
  $region45: #{upsample_conv_transpose3d.1} parent=0
    _
  %s6 = ssub.s32 1, %s4
  %s7 = scalar_select 0, %s6, %s4
  loop: start=0, step=1, limit=18
  $region2: #{upsample_conv_transpose3d.1} parent=0 // loop_pre_header
    _
  $region3: #{upsample_conv_transpose3d.1} parent=0 // loop_header
    %s9 = sphi 0, %s13
    %p10 = scmp.ge.s32.totalorder %s9, 18
    %s16 = sphi 0, %s35
    %s17 = sphi 0, %s31
    %s18 = sphi 0, %s27
    %s19 = sphi 0, %s16
    %s20 = sphi 0, %s17
    %s21 = sphi 0, %s18
    %s22 = sphi 0, %s19
    %s23 = sphi 0, %s20
    %s24 = sphi 0, %s21
    %s40 = sphi 0, %s42
    %s43 = sphi 0, %s40
    %s44 = sphi 0, %s43
    %s60 = sphi 0, %s44
    %s66 = sphi 0, %s68
    %s69 = sphi 0, %s66
    %s70 = sphi 0, %s69
    %s86 = sphi 0, %s70
    %s92 = sphi 0, %s94
    %s95 = sphi 0, %s92
    %s96 = sphi 0, %s95
    %s112 = sphi 0, %s96
    %s122 = sphi 0, %s124
    %s125 = sphi 0, %s122
    %s126 = sphi 0, %s125
    %s142 = sphi 0, %s126
  $region4: #{upsample_conv_transpose3d.1} parent=0 // loop_header_branch
    %12 = sbr.rel (%p10) target = $region8
  $region5: #{upsample_conv_transpose3d.1} parent=0 // loop_body
    %s14 = ssub.s32 %s9, 1
    %s15 = ssub.s32 %s9, 2
    %s25 = sadd.s32 1, %s18
    %p26 = scmp.ge.s32.totalorder %s25, 8
    %s27 = scalar_select %p26, 0, %s25
    %s28 = sadd.s32 1, %s17
    %s29 = scalar_select %p26, %s28, %s17
    %p30 = scmp.ge.s32.totalorder %s29, 2
    %s31 = scalar_select %p30, 0, %s29
    %s32 = sadd.s32 1, %s16
    %s33 = scalar_select %p30, %s32, %s16
    %p34 = scmp.ge.s32.totalorder %s33, 1
    %s35 = scalar_select %p34, 0, %s33
    %s36 = ssub.s32 %s17, %s31
    %s37 = ssub.s32 %s18, %s27
    %s38 = sor.u32 %s36, %s37
    %p39 = scmp.eq.s32.totalorder %s38, 0
    %s41 = sadd.s32 %s40, 1
    %s42 = scalar_select %p39, %s40, %s41
    %p45 = pneg %p39
    %p46 = scmp.eq.s32.totalorder %s9, 15
    %p47 = por %p45, %p46
    %p48 = scmp.ne.s32.totalorder %s40, %s43
    %p49 = scmp.eq.s32.totalorder %s9, 0
    %p50 = por %p48, %p49
    %p51 = scmp.ne.s32.totalorder %s40, %s43
    %p52 = scmp.eq.s32.totalorder %s14, 15
    %p53 = por %p51, %p52
    %p54 = scmp.ne.s32.totalorder %s43, %s44
    %p55 = scmp.eq.s32.totalorder %s14, 0
    %p56 = por %p54, %p55
    %p57 = scmp.ne.s32.totalorder %s43, %s44
    %p58 = scmp.eq.s32.totalorder %s15, 15
    %p59 = por %p57, %p58
    %p61 = scmp.ne.s32.totalorder %s44, %s60
    %p62 = scmp.eq.s32.totalorder %s15, 0
    %p63 = por %p61, %p62
    %s64 = ssub.s32 %s16, %s35
    %p65 = scmp.eq.s32.totalorder %s64, 0
    %s67 = sadd.s32 %s66, 1
    %s68 = scalar_select %p65, %s66, %s67
    %p71 = pneg %p65
    %p72 = scmp.eq.s32.totalorder %s9, 15
    %p73 = por %p71, %p72
    %p74 = scmp.ne.s32.totalorder %s66, %s69
    %p75 = scmp.eq.s32.totalorder %s9, 0
    %p76 = por %p74, %p75
    %p77 = scmp.ne.s32.totalorder %s66, %s69
    %p78 = scmp.eq.s32.totalorder %s14, 15
    %p79 = por %p77, %p78
    %p80 = scmp.ne.s32.totalorder %s69, %s70
    %p81 = scmp.eq.s32.totalorder %s14, 0
    %p82 = por %p80, %p81
    %p83 = scmp.ne.s32.totalorder %s69, %s70
    %p84 = scmp.eq.s32.totalorder %s15, 15
    %p85 = por %p83, %p84
    %p87 = scmp.ne.s32.totalorder %s70, %s86
    %p88 = scmp.eq.s32.totalorder %s15, 0
    %p89 = por %p87, %p88
    %s90 = ssub.s32 %s16, %s35
    %p91 = scmp.eq.s32.totalorder %s90, 0
    %s93 = sadd.s32 %s92, 1
    %s94 = scalar_select %p91, %s92, %s93
    %p97 = pneg %p91
    %p98 = scmp.eq.s32.totalorder %s9, 15
    %p99 = por %p97, %p98
    %p100 = scmp.ne.s32.totalorder %s92, %s95
    %p101 = scmp.eq.s32.totalorder %s9, 0
    %p102 = por %p100, %p101
    %p103 = scmp.ne.s32.totalorder %s92, %s95
    %p104 = scmp.eq.s32.totalorder %s14, 15
    %p105 = por %p103, %p104
    %p106 = scmp.ne.s32.totalorder %s95, %s96
    %p107 = scmp.eq.s32.totalorder %s14, 0
    %p108 = por %p106, %p107
    %p109 = scmp.ne.s32.totalorder %s95, %s96
    %p110 = scmp.eq.s32.totalorder %s15, 15
    %p111 = por %p109, %p110
    %p113 = scmp.ne.s32.totalorder %s96, %s112
    %p114 = scmp.eq.s32.totalorder %s15, 0
    %p115 = por %p113, %p114
    %s116 = ssub.s32 %s17, %s31
    %s117 = ssub.s32 %s18, %s27
    %s118 = sor.u32 %s116, %s117
    %s119 = ssub.s32 %s16, %s35
    %s120 = sor.u32 %s118, %s119
    %p121 = scmp.eq.s32.totalorder %s120, 0
    %s123 = sadd.s32 %s122, 1
    %s124 = scalar_select %p121, %s122, %s123
    %p127 = pneg %p121
    %p128 = scmp.eq.s32.totalorder %s9, 15
    %p129 = por %p127, %p128
    %p130 = scmp.ne.s32.totalorder %s122, %s125
    %p131 = scmp.eq.s32.totalorder %s9, 0
    %p132 = por %p130, %p131
    %p133 = scmp.ne.s32.totalorder %s122, %s125
    %p134 = scmp.eq.s32.totalorder %s14, 15
    %p135 = por %p133, %p134
    %p136 = scmp.ne.s32.totalorder %s125, %s126
    %p137 = scmp.eq.s32.totalorder %s14, 0
    %p138 = por %p136, %p137
    %p139 = scmp.ne.s32.totalorder %s125, %s126
    %p140 = scmp.eq.s32.totalorder %s15, 15
    %p141 = por %p139, %p140
    %p143 = scmp.ne.s32.totalorder %s126, %s142
    %p144 = scmp.eq.s32.totalorder %s15, 0
    %p145 = por %p143, %p144
    %p146 = scmp.le.s32.totalorder 1, %s9
    %p147 = scmp.lt.s32.totalorder %s9, 17
    %p148 = pnand %p146, %p147
    %p149 = pneg %p148
    // Predicated region
    $region9: #{upsample_conv_transpose3d.1} parent=5 // pred_check
      _
    $region10: #{upsample_conv_transpose3d.1} parent=5 // pred_check_branch
      %151 = sbr.rel (%p148) target = $region12
    $region11: #{upsample_conv_transpose3d.1} parent=5 // pred_region
      %s152 = ssub.s32 %s9, 1
      // Predicated region
      $region13: #{upsample_conv_transpose3d.1} parent=11 // pred_check
        %p153 = pneg %p82
      $region14: #{upsample_conv_transpose3d.1} parent=11 // pred_check_branch
        %155 = sbr.rel (%p153) target = $region16
      $region15: #{upsample_conv_transpose3d.1} parent=11 // pred_region
        %p156 = scmp.lt.s32.totalorder %s19, 0
        %s157 = scalar_select %p156, %s19, 0
        %s158 = smul.addr %s157, 4
        %s159 = scalar_lea.vmem %s1, %s158
      $region16: #{upsample_conv_transpose3d.1} parent=11 // pred_fallthru
        _
      // Predicated region
      $region17: #{upsample_conv_transpose3d.1} parent=11 // pred_check
        %p160 = pneg %p108
      $region18: #{upsample_conv_transpose3d.1} parent=11 // pred_check_branch
        %162 = sbr.rel (%p160) target = $region20
      $region19: #{upsample_conv_transpose3d.1} parent=11 // pred_region
        %p163 = scmp.lt.s32.totalorder %s19, 0
        %s164 = scalar_select %p163, %s19, 0
        %s165 = scalar_lea.vmem %s2, %s164
      $region20: #{upsample_conv_transpose3d.1} parent=11 // pred_fallthru
        _
    $region12: #{upsample_conv_transpose3d.1} parent=5 // pred_fallthru
      _
    %p166 = scmp.lt.s32.totalorder %s9, 16
    // Predicated region
    $region21: #{upsample_conv_transpose3d.1} parent=5 // pred_check
      %p167 = pneg %p166
    $region22: #{upsample_conv_transpose3d.1} parent=5 // pred_check_branch
      %169 = sbr.rel (%p167) target = $region24
    $region23: #{upsample_conv_transpose3d.1} parent=5 // pred_region
      // Predicated region
      $region25: #{upsample_conv_transpose3d.1} parent=23 // pred_check
        %p170 = pneg %p50
      $region26: #{upsample_conv_transpose3d.1} parent=23 // pred_check_branch
        %172 = sbr.rel (%p170) target = $region28
      $region27: #{upsample_conv_transpose3d.1} parent=23 // pred_region
        %p173 = scmp.lt.s32.totalorder %s17, 1
        %s174 = scalar_select %p173, %s17, 1
        %p175 = scmp.lt.s32.totalorder %s18, 7
        %s176 = scalar_select %p175, %s18, 7
        %s177 = smul.addr %s176, 20
        %s178 = smul.addr %s174, 160
        %s179 = sadd.s32 %s177, %s178
        %s180 = smul.addr %s179, 8
        %s181 = scalar_lea.vmem %s0, %s180
      $region28: #{upsample_conv_transpose3d.1} parent=23 // pred_fallthru
        _
    $region24: #{upsample_conv_transpose3d.1} parent=5 // pred_fallthru
      _
    %p182 = scmp.le.s32.totalorder 1, %s9
    %p183 = scmp.lt.s32.totalorder %s9, 17
    %p184 = pnand %p182, %p183
    %p185 = pneg %p184
    // Predicated region
    $region29: #{upsample_conv_transpose3d.1} parent=5 // pred_check
      _
    $region30: #{upsample_conv_transpose3d.1} parent=5 // pred_check_branch
      %187 = sbr.rel (%p184) target = $region32
    $region31: #{upsample_conv_transpose3d.1} parent=5 // pred_region
      %s188 = ssub.s32 %s9, 1
      %p189 = scmp.lt.s32.totalorder %s20, 1
      %s190 = scalar_select %p189, %s20, 1
      %p191 = scmp.lt.s32.totalorder %s21, 7
      %s192 = scalar_select %p191, %s21, 7
      %s193 = smul.addr %s192, 20
      %s194 = smul.addr %s190, 160
      %s195 = sadd.s32 %s193, %s194
      %s196 = smul.addr %s195, 8
      %s197 = scalar_lea.vmem %s0, %s196
      %p198 = pneg %p56
      %p199 = pneg %p53
      %p200 = scmp.lt.s32.totalorder %s19, 0
      %s201 = scalar_select %p200, %s19, 0
      %s202 = smul.addr %s201, 4
      %s203 = scalar_lea.vmem %s1, %s202
      %p204 = pneg %p82
      %p205 = pneg %p79
      %p206 = scmp.lt.s32.totalorder %s19, 0
      %s207 = scalar_select %p206, %s19, 0
      %s208 = scalar_lea.vmem %s2, %s207
      %p209 = pneg %p108
      %p210 = pneg %p105
      %p211 = pneg %p138
      %p212 = pneg %p135
      %p213 = scmp.lt.s32.totalorder %s20, 1
      %s214 = scalar_select %p213, %s20, 1
      %p215 = scmp.lt.s32.totalorder %s21, 7
      %s216 = scalar_select %p215, %s21, 7
      %p217 = scmp.lt.s32.totalorder %s19, 0
      %s218 = scalar_select %p217, %s19, 0
      %s219 = smul.addr %s216, 8
      %s220 = sadd.s32 %s218, %s219
      %s221 = smul.addr %s214, 64
      %s222 = sadd.s32 %s220, %s221
      %s223 = smul.addr %s222, 8
      %s224 = scalar_lea.vmem %s3, %s223
      %p225 = scmp.lt.s32.totalorder %s20, 1
      %s226 = scalar_select %p225, %s20, 1
      %p227 = scmp.lt.s32.totalorder %s21, 7
      %s228 = scalar_select %p227, %s21, 7
      %s229 = smul.addr %s228, 20
      %s230 = smul.addr %s226, 160
      %s231 = sadd.s32 %s229, %s230
      %s232 = smul.addr %s231, 8
      %s233 = scalar_lea.vmem %s0, %s232
      %p234 = scmp.lt.s32.totalorder %s19, 0
      %s235 = scalar_select %p234, %s19, 0
      %s236 = smul.addr %s235, 4
      %s237 = scalar_lea.vmem %s1, %s236
      %p238 = scmp.lt.s32.totalorder %s19, 0
      %s239 = scalar_select %p238, %s19, 0
      %s240 = scalar_lea.vmem %s2, %s239
      %p241 = scmp.lt.s32.totalorder %s20, 1
      %s242 = scalar_select %p241, %s20, 1
      %p243 = scmp.lt.s32.totalorder %s21, 7
      %s244 = scalar_select %p243, %s21, 7
      %p245 = scmp.lt.s32.totalorder %s19, 0
      %s246 = scalar_select %p245, %s19, 0
      %s247 = smul.addr %s244, 8
      %s248 = sadd.s32 %s246, %s247
      %s249 = smul.addr %s242, 64
      %s250 = sadd.s32 %s248, %s249
      %s251 = smul.addr %s250, 8
      %s252 = scalar_lea.vmem %s3, %s251
      %v254 = vld [vmem:[%s233] sm:$0xff]
      %v255 = vld [vmem:[%s233 + $0x10] sm:$0xff]
      %v256 = vld [vmem:[%s233 + $0x20] sm:$0xff]
      %v257 = vld [vmem:[%s233 + $0x30] sm:$0xff]
      %v258 = vld [vmem:[%s233 + $0x40] sm:$0xff]
      %v259 = vld [vmem:[%s233 + $0x50] sm:$0xff]
      %v260 = vld [vmem:[%s233 + $0x60] sm:$0xff]
      %v261 = vld [vmem:[%s233 + $0x70] sm:$0xff]
      %v262 = vpack.c.bf16 %v255, %v254
      %v263 = vpack.c.bf16 %v257, %v256
      %v264 = vpack.c.bf16 %v259, %v258
      %v265 = vpack.c.bf16 %v261, %v260
      %v266 = vld [vmem:[%s237] sm:$0xf]
      %v267 = vld [vmem:[%s237 + $0x4] sm:$0x3]
      %v268 = vld [vmem:[%s233 + $0x1] sm:$0xff]
      %v269 = vld [vmem:[%s233 + $0x11] sm:$0xff]
      %v270 = vld [vmem:[%s233 + $0x21] sm:$0xff]
      %v271 = vld [vmem:[%s233 + $0x31] sm:$0xff]
      %v272 = vld [vmem:[%s233 + $0x41] sm:$0xff]
      %v273 = vld [vmem:[%s233 + $0x51] sm:$0xff]
      %v274 = vld [vmem:[%s233 + $0x61] sm:$0xff]
      %v275 = vld [vmem:[%s233 + $0x71] sm:$0xff]
      %v276 = vpack.c.bf16 %v269, %v268
      %v277 = vpack.c.bf16 %v271, %v270
      %v278 = vpack.c.bf16 %v273, %v272
      %v279 = vpack.c.bf16 %v275, %v274
      %v280 = vld [vmem:[%s237 + $0x4] sm:$0xc]
      %v281 = vld [vmem:[%s237 + $0x8] sm:$0xf]
      %v284 = vunpack.c.l.b16 %v280
      %v285 = vunpack.c.l.b16 %v281
      %v286 = vpack.c.b16 %v285, %v284
      %v287 = vrot.slane %v286, 2
      %vm288 = vcmask 97280
      %v290 = vsel %vm288, %v276, 0
      %v293 = vsel %vm288, %v277, 0
      %v296 = vsel %vm288, %v278, 0
      %v299 = vsel %vm288, %v279, 0
      %vm301 = vcmask 1045504
      %v303 = vsel %vm301, %v287, 0
      %305 = vmatpush.bf16.msra.mxu0 0
      %306 = vmatpush.bf16.msra.mxu0 0
      %307 = vmatpush.bf16.msra.mxu0 0
      %308 = vmatpush.bf16.msra.mxu0 0
      %309 = vmatpush.bf16.msra.mxu0 0
      %310 = vmatpush.bf16.msra.mxu0 0
      %311 = vmatpush.bf16.msra.mxu0 0
      %312 = vmatpush.bf16.msra.mxu0 %v303
      %313 = vmatmul.bf16.gmra.mxu0 %v290
      %v314 = vpop.f32.mrf.mxu0
      %v315 = vadd.f32 0.0, %v314
      %v316 = vpop.f32.mrf.mxu0
      %v317 = vadd.f32 0.0, %v316
      %318 = vmatmul.bf16.gmra.mxu0 %v293
      %v319 = vpop.f32.mrf.mxu0
      %v320 = vadd.f32 0.0, %v319
      %v321 = vpop.f32.mrf.mxu0
      %v322 = vadd.f32 0.0, %v321
      %323 = vmatmul.bf16.gmra.mxu0 %v296
      %v324 = vpop.f32.mrf.mxu0
      %v325 = vadd.f32 0.0, %v324
      %v326 = vpop.f32.mrf.mxu0
      %v327 = vadd.f32 0.0, %v326
      %328 = vmatmul.bf16.gmra.mxu0 %v299
      %v329 = vpop.f32.mrf.mxu0
      %v330 = vadd.f32 0.0, %v329
      %v331 = vpop.f32.mrf.mxu0
      %v332 = vadd.f32 0.0, %v331
      %333 = vdwg.mxu0
      %v336 = vunpack.c.l.b16 %v266
      %v337 = vunpack.c.l.b16 %v267
      %v338 = vpack.c.b16 %v337, %v336
      %v340 = vsel %vm288, %v262, 0
      %v343 = vsel %vm288, %v263, 0
      %v346 = vsel %vm288, %v264, 0
      %v349 = vsel %vm288, %v265, 0
      %v352 = vsel %vm301, %v338, 0
      %354 = vmatpush.bf16.msra.mxu0 0
      %355 = vmatpush.bf16.msra.mxu0 0
      %356 = vmatpush.bf16.msra.mxu0 0
      %357 = vmatpush.bf16.msra.mxu0 0
      %358 = vmatpush.bf16.msra.mxu0 0
      %359 = vmatpush.bf16.msra.mxu0 0
      %360 = vmatpush.bf16.msra.mxu0 0
      %361 = vmatpush.bf16.msra.mxu0 %v352
      %362 = vmatmul.bf16.gmra.mxu0 %v340
      %v363 = vpop.f32.mrf.mxu0
      %v364 = vadd.f32 %v315, %v363
      %v365 = vpop.f32.mrf.mxu0
      %v366 = vadd.f32 %v317, %v365
      %367 = vmatmul.bf16.gmra.mxu0 %v343
      %v368 = vpop.f32.mrf.mxu0
      %v369 = vadd.f32 %v320, %v368
      %v370 = vpop.f32.mrf.mxu0
      %v371 = vadd.f32 %v322, %v370
      %372 = vmatmul.bf16.gmra.mxu0 %v346
      %v373 = vpop.f32.mrf.mxu0
      %v374 = vadd.f32 %v325, %v373
      %v375 = vpop.f32.mrf.mxu0
      %v376 = vadd.f32 %v327, %v375
      %377 = vmatmul.bf16.gmra.mxu0 %v349
      %v378 = vpop.f32.mrf.mxu0
      %v379 = vadd.f32 %v330, %v378
      %v380 = vpop.f32.mrf.mxu0
      %v381 = vadd.f32 %v332, %v380
      %382 = vdwg.mxu0
      %v383 = vld [vmem:[%s233 + $0x2] sm:$0xff]
      %v384 = vld [vmem:[%s233 + $0x12] sm:$0xff]
      %v385 = vld [vmem:[%s233 + $0x22] sm:$0xff]
      %v386 = vld [vmem:[%s233 + $0x32] sm:$0xff]
      %v387 = vld [vmem:[%s233 + $0x42] sm:$0xff]
      %v388 = vld [vmem:[%s233 + $0x52] sm:$0xff]
      %v389 = vld [vmem:[%s233 + $0x62] sm:$0xff]
      %v390 = vld [vmem:[%s233 + $0x72] sm:$0xff]
      %v391 = vpack.c.bf16 %v384, %v383
      %v392 = vpack.c.bf16 %v386, %v385
      %v393 = vpack.c.bf16 %v388, %v387
      %v394 = vpack.c.bf16 %v390, %v389
      %v395 = vld [vmem:[%s237 + $0xc] sm:$0xf]
      %v396 = vld [vmem:[%s237 + $0x10] sm:$0x3]
      %v399 = vunpack.c.l.b16 %v395
      %v400 = vunpack.c.l.b16 %v396
      %v401 = vpack.c.b16 %v400, %v399
      %v403 = vsel %vm288, %v391, 0
      %v406 = vsel %vm288, %v392, 0
      %v409 = vsel %vm288, %v393, 0
      %v412 = vsel %vm288, %v394, 0
      %v415 = vsel %vm301, %v401, 0
      %417 = vmatpush.bf16.msra.mxu0 0
      %418 = vmatpush.bf16.msra.mxu0 0
      %419 = vmatpush.bf16.msra.mxu0 0
      %420 = vmatpush.bf16.msra.mxu0 0
      %421 = vmatpush.bf16.msra.mxu0 0
      %422 = vmatpush.bf16.msra.mxu0 0
      %423 = vmatpush.bf16.msra.mxu0 0
      %424 = vmatpush.bf16.msra.mxu0 %v415
      %425 = vmatmul.bf16.gmra.mxu0 %v403
      %v426 = vpop.f32.mrf.mxu0
      %v427 = vadd.f32 0.0, %v426
      %v428 = vpop.f32.mrf.mxu0
      %v429 = vadd.f32 0.0, %v428
      %430 = vmatmul.bf16.gmra.mxu0 %v406
      %v431 = vpop.f32.mrf.mxu0
      %v432 = vadd.f32 0.0, %v431
      %v433 = vpop.f32.mrf.mxu0
      %v434 = vadd.f32 0.0, %v433
      %435 = vmatmul.bf16.gmra.mxu0 %v409
      %v436 = vpop.f32.mrf.mxu0
      %v437 = vadd.f32 0.0, %v436
      %v438 = vpop.f32.mrf.mxu0
      %v439 = vadd.f32 0.0, %v438
      %440 = vmatmul.bf16.gmra.mxu0 %v412
      %v441 = vpop.f32.mrf.mxu0
      %v442 = vadd.f32 0.0, %v441
      %v443 = vpop.f32.mrf.mxu0
      %v444 = vadd.f32 0.0, %v443
      %445 = vdwg.mxu0
      %v446 = vadd.f32 %v364, %v427
      %v447 = vadd.f32 %v366, %v429
      %v448 = vadd.f32 %v369, %v432
      %v449 = vadd.f32 %v371, %v434
      %v450 = vadd.f32 %v374, %v437
      %v451 = vadd.f32 %v376, %v439
      %v452 = vadd.f32 %v379, %v442
      %v453 = vadd.f32 %v381, %v444
      %s454 = scalar_lea.vmem %s233, 16
      %v455 = vld [vmem:[%s454] sm:$0xff]
      %v456 = vld [vmem:[%s454 + $0x10] sm:$0xff]
      %v457 = vld [vmem:[%s454 + $0x20] sm:$0xff]
      %v458 = vld [vmem:[%s454 + $0x30] sm:$0xff]
      %v459 = vld [vmem:[%s454 + $0x40] sm:$0xff]
      %v460 = vld [vmem:[%s454 + $0x50] sm:$0xff]
      %v461 = vld [vmem:[%s454 + $0x60] sm:$0xff]
      %v462 = vld [vmem:[%s454 + $0x70] sm:$0xff]
      %v463 = vpack.c.bf16 %v456, %v455
      %v464 = vpack.c.bf16 %v458, %v457
      %v465 = vpack.c.bf16 %v460, %v459
      %v466 = vpack.c.bf16 %v462, %v461
      %v467 = vld [vmem:[%s237 + $0x10] sm:$0xc]
      %v468 = vld [vmem:[%s237 + $0x14] sm:$0xf]
      %v471 = vunpack.c.l.b16 %v467
      %v472 = vunpack.c.l.b16 %v468
      %v473 = vpack.c.b16 %v472, %v471
      %v474 = vrot.slane %v473, 2
      %v476 = vsel %vm288, %v463, 0
      %v479 = vsel %vm288, %v464, 0
      %v482 = vsel %vm288, %v465, 0
      %v485 = vsel %vm288, %v466, 0
      %v488 = vsel %vm301, %v474, 0
      %490 = vmatpush.bf16.msra.mxu0 0
      %491 = vmatpush.bf16.msra.mxu0 0
      %492 = vmatpush.bf16.msra.mxu0 0
      %493 = vmatpush.bf16.msra.mxu0 0
      %494 = vmatpush.bf16.msra.mxu0 0
      %495 = vmatpush.bf16.msra.mxu0 0
      %496 = vmatpush.bf16.msra.mxu0 0
      %497 = vmatpush.bf16.msra.mxu0 %v488
      %498 = vmatmul.bf16.gmra.mxu0 %v476
      %v499 = vpop.f32.mrf.mxu0
      %v500 = vadd.f32 0.0, %v499
      %v501 = vpop.f32.mrf.mxu0
      %v502 = vadd.f32 0.0, %v501
      %503 = vmatmul.bf16.gmra.mxu0 %v479
      %v504 = vpop.f32.mrf.mxu0
      %v505 = vadd.f32 0.0, %v504
      %v506 = vpop.f32.mrf.mxu0
      %v507 = vadd.f32 0.0, %v506
      %508 = vmatmul.bf16.gmra.mxu0 %v482
      %v509 = vpop.f32.mrf.mxu0
      %v510 = vadd.f32 0.0, %v509
      %v511 = vpop.f32.mrf.mxu0
      %v512 = vadd.f32 0.0, %v511
      %513 = vmatmul.bf16.gmra.mxu0 %v485
      %v514 = vpop.f32.mrf.mxu0
      %v515 = vadd.f32 0.0, %v514
      %v516 = vpop.f32.mrf.mxu0
      %v517 = vadd.f32 0.0, %v516
      %518 = vdwg.mxu0
      %v519 = vadd.f32 %v446, %v500
      %v520 = vadd.f32 %v447, %v502
      %v521 = vadd.f32 %v448, %v505
      %v522 = vadd.f32 %v449, %v507
      %v523 = vadd.f32 %v450, %v510
      %v524 = vadd.f32 %v451, %v512
      %v525 = vadd.f32 %v452, %v515
      %v526 = vadd.f32 %v453, %v517
      %v527 = vld [vmem:[%s454 + $0x1] sm:$0xff]
      %v528 = vld [vmem:[%s454 + $0x11] sm:$0xff]
      %v529 = vld [vmem:[%s454 + $0x21] sm:$0xff]
      %v530 = vld [vmem:[%s454 + $0x31] sm:$0xff]
      %v531 = vld [vmem:[%s454 + $0x41] sm:$0xff]
      %v532 = vld [vmem:[%s454 + $0x51] sm:$0xff]
      %v533 = vld [vmem:[%s454 + $0x61] sm:$0xff]
      %v534 = vld [vmem:[%s454 + $0x71] sm:$0xff]
      %v535 = vpack.c.bf16 %v528, %v527
      %v536 = vpack.c.bf16 %v530, %v529
      %v537 = vpack.c.bf16 %v532, %v531
      %v538 = vpack.c.bf16 %v534, %v533
      %v539 = vld [vmem:[%s237 + $0x18] sm:$0xf]
      %v540 = vld [vmem:[%s237 + $0x1c] sm:$0x3]
      %v543 = vunpack.c.l.b16 %v539
      %v544 = vunpack.c.l.b16 %v540
      %v545 = vpack.c.b16 %v544, %v543
      %v547 = vsel %vm288, %v535, 0
      %v550 = vsel %vm288, %v536, 0
      %v553 = vsel %vm288, %v537, 0
      %v556 = vsel %vm288, %v538, 0
      %v559 = vsel %vm301, %v545, 0
      %561 = vmatpush.bf16.msra.mxu0 0
      %562 = vmatpush.bf16.msra.mxu0 0
      %563 = vmatpush.bf16.msra.mxu0 0
      %564 = vmatpush.bf16.msra.mxu0 0
      %565 = vmatpush.bf16.msra.mxu0 0
      %566 = vmatpush.bf16.msra.mxu0 0
      %567 = vmatpush.bf16.msra.mxu0 0
      %568 = vmatpush.bf16.msra.mxu0 %v559
      %569 = vmatmul.bf16.gmra.mxu0 %v547
      %v570 = vpop.f32.mrf.mxu0
      %v571 = vadd.f32 0.0, %v570
      %v572 = vpop.f32.mrf.mxu0
      %v573 = vadd.f32 0.0, %v572
      %574 = vmatmul.bf16.gmra.mxu0 %v550
      %v575 = vpop.f32.mrf.mxu0
      %v576 = vadd.f32 0.0, %v575
      %v577 = vpop.f32.mrf.mxu0
      %v578 = vadd.f32 0.0, %v577
      %579 = vmatmul.bf16.gmra.mxu0 %v553
      %v580 = vpop.f32.mrf.mxu0
      %v581 = vadd.f32 0.0, %v580
      %v582 = vpop.f32.mrf.mxu0
      %v583 = vadd.f32 0.0, %v582
      %584 = vmatmul.bf16.gmra.mxu0 %v556
      %v585 = vpop.f32.mrf.mxu0
      %v586 = vadd.f32 0.0, %v585
      %v587 = vpop.f32.mrf.mxu0
      %v588 = vadd.f32 0.0, %v587
      %589 = vdwg.mxu0
      %v590 = vadd.f32 %v519, %v571
      %v591 = vadd.f32 %v520, %v573
      %v592 = vadd.f32 %v521, %v576
      %v593 = vadd.f32 %v522, %v578
      %v594 = vadd.f32 %v523, %v581
      %v595 = vadd.f32 %v524, %v583
      %v596 = vadd.f32 %v525, %v586
      %v597 = vadd.f32 %v526, %v588
      %v598 = vld [vmem:[%s454 + $0x2] sm:$0xff]
      %v599 = vld [vmem:[%s454 + $0x12] sm:$0xff]
      %v600 = vld [vmem:[%s454 + $0x22] sm:$0xff]
      %v601 = vld [vmem:[%s454 + $0x32] sm:$0xff]
      %v602 = vld [vmem:[%s454 + $0x42] sm:$0xff]
      %v603 = vld [vmem:[%s454 + $0x52] sm:$0xff]
      %v604 = vld [vmem:[%s454 + $0x62] sm:$0xff]
      %v605 = vld [vmem:[%s454 + $0x72] sm:$0xff]
      %v606 = vpack.c.bf16 %v599, %v598
      %v607 = vpack.c.bf16 %v601, %v600
      %v608 = vpack.c.bf16 %v603, %v602
      %v609 = vpack.c.bf16 %v605, %v604
      %v610 = vld [vmem:[%s237 + $0x1c] sm:$0xc]
      %v611 = vld [vmem:[%s237 + $0x20] sm:$0xf]
      %v614 = vunpack.c.l.b16 %v610
      %v615 = vunpack.c.l.b16 %v611
      %v616 = vpack.c.b16 %v615, %v614
      %v617 = vrot.slane %v616, 2
      %v619 = vsel %vm288, %v606, 0
      %v622 = vsel %vm288, %v607, 0
      %v625 = vsel %vm288, %v608, 0
      %v628 = vsel %vm288, %v609, 0
      %v631 = vsel %vm301, %v617, 0
      %633 = vmatpush.bf16.msra.mxu0 0
      %634 = vmatpush.bf16.msra.mxu0 0
      %635 = vmatpush.bf16.msra.mxu0 0
      %636 = vmatpush.bf16.msra.mxu0 0
      %637 = vmatpush.bf16.msra.mxu0 0
      %638 = vmatpush.bf16.msra.mxu0 0
      %639 = vmatpush.bf16.msra.mxu0 0
      %640 = vmatpush.bf16.msra.mxu0 %v631
      %641 = vmatmul.bf16.gmra.mxu0 %v619
      %v642 = vpop.f32.mrf.mxu0
      %v643 = vadd.f32 0.0, %v642
      %v644 = vpop.f32.mrf.mxu0
      %v645 = vadd.f32 0.0, %v644
      %646 = vmatmul.bf16.gmra.mxu0 %v622
      %v647 = vpop.f32.mrf.mxu0
      %v648 = vadd.f32 0.0, %v647
      %v649 = vpop.f32.mrf.mxu0
      %v650 = vadd.f32 0.0, %v649
      %651 = vmatmul.bf16.gmra.mxu0 %v625
      %v652 = vpop.f32.mrf.mxu0
      %v653 = vadd.f32 0.0, %v652
      %v654 = vpop.f32.mrf.mxu0
      %v655 = vadd.f32 0.0, %v654
      %656 = vmatmul.bf16.gmra.mxu0 %v628
      %v657 = vpop.f32.mrf.mxu0
      %v658 = vadd.f32 0.0, %v657
      %v659 = vpop.f32.mrf.mxu0
      %v660 = vadd.f32 0.0, %v659
      %661 = vdwg.mxu0
      %v662 = vadd.f32 %v590, %v643
      %v663 = vadd.f32 %v591, %v645
      %v664 = vadd.f32 %v592, %v648
      %v665 = vadd.f32 %v593, %v650
      %v666 = vadd.f32 %v594, %v653
      %v667 = vadd.f32 %v595, %v655
      %v668 = vadd.f32 %v596, %v658
      %v669 = vadd.f32 %v597, %v660
      %s670 = scalar_lea.vmem %s233, 32
      %v671 = vld [vmem:[%s670] sm:$0xff]
      %v672 = vld [vmem:[%s670 + $0x10] sm:$0xff]
      %v673 = vld [vmem:[%s670 + $0x20] sm:$0xff]
      %v674 = vld [vmem:[%s670 + $0x30] sm:$0xff]
      %v675 = vld [vmem:[%s670 + $0x40] sm:$0xff]
      %v676 = vld [vmem:[%s670 + $0x50] sm:$0xff]
      %v677 = vld [vmem:[%s670 + $0x60] sm:$0xff]
      %v678 = vld [vmem:[%s670 + $0x70] sm:$0xff]
      %v679 = vpack.c.bf16 %v672, %v671
      %v680 = vpack.c.bf16 %v674, %v673
      %v681 = vpack.c.bf16 %v676, %v675
      %v682 = vpack.c.bf16 %v678, %v677
      %v683 = vld [vmem:[%s237 + $0x24] sm:$0xf]
      %v684 = vld [vmem:[%s237 + $0x28] sm:$0x3]
      %v687 = vunpack.c.l.b16 %v683
      %v688 = vunpack.c.l.b16 %v684
      %v689 = vpack.c.b16 %v688, %v687
      %v691 = vsel %vm288, %v679, 0
      %v694 = vsel %vm288, %v680, 0
      %v697 = vsel %vm288, %v681, 0
      %v700 = vsel %vm288, %v682, 0
      %v703 = vsel %vm301, %v689, 0
      %705 = vmatpush.bf16.msra.mxu0 0
      %706 = vmatpush.bf16.msra.mxu0 0
      %707 = vmatpush.bf16.msra.mxu0 0
      %708 = vmatpush.bf16.msra.mxu0 0
      %709 = vmatpush.bf16.msra.mxu0 0
      %710 = vmatpush.bf16.msra.mxu0 0
      %711 = vmatpush.bf16.msra.mxu0 0
      %712 = vmatpush.bf16.msra.mxu0 %v703
      %713 = vmatmul.bf16.gmra.mxu0 %v691
      %v714 = vpop.f32.mrf.mxu0
      %v715 = vadd.f32 0.0, %v714
      %v716 = vpop.f32.mrf.mxu0
      %v717 = vadd.f32 0.0, %v716
      %718 = vmatmul.bf16.gmra.mxu0 %v694
      %v719 = vpop.f32.mrf.mxu0
      %v720 = vadd.f32 0.0, %v719
      %v721 = vpop.f32.mrf.mxu0
      %v722 = vadd.f32 0.0, %v721
      %723 = vmatmul.bf16.gmra.mxu0 %v697
      %v724 = vpop.f32.mrf.mxu0
      %v725 = vadd.f32 0.0, %v724
      %v726 = vpop.f32.mrf.mxu0
      %v727 = vadd.f32 0.0, %v726
      %728 = vmatmul.bf16.gmra.mxu0 %v700
      %v729 = vpop.f32.mrf.mxu0
      %v730 = vadd.f32 0.0, %v729
      %v731 = vpop.f32.mrf.mxu0
      %v732 = vadd.f32 0.0, %v731
      %733 = vdwg.mxu0
      %v734 = vadd.f32 %v662, %v715
      %v735 = vadd.f32 %v663, %v717
      %v736 = vadd.f32 %v664, %v720
      %v737 = vadd.f32 %v665, %v722
      %v738 = vadd.f32 %v666, %v725
      %v739 = vadd.f32 %v667, %v727
      %v740 = vadd.f32 %v668, %v730
      %v741 = vadd.f32 %v669, %v732
      %v742 = vld [vmem:[%s670 + $0x1] sm:$0xff]
      %v743 = vld [vmem:[%s670 + $0x11] sm:$0xff]
      %v744 = vld [vmem:[%s670 + $0x21] sm:$0xff]
      %v745 = vld [vmem:[%s670 + $0x31] sm:$0xff]
      %v746 = vld [vmem:[%s670 + $0x41] sm:$0xff]
      %v747 = vld [vmem:[%s670 + $0x51] sm:$0xff]
      %v748 = vld [vmem:[%s670 + $0x61] sm:$0xff]
      %v749 = vld [vmem:[%s670 + $0x71] sm:$0xff]
      %v750 = vpack.c.bf16 %v743, %v742
      %v751 = vpack.c.bf16 %v745, %v744
      %v752 = vpack.c.bf16 %v747, %v746
      %v753 = vpack.c.bf16 %v749, %v748
      %v754 = vld [vmem:[%s237 + $0x28] sm:$0xc]
      %v755 = vld [vmem:[%s237 + $0x2c] sm:$0xf]
      %v758 = vunpack.c.l.b16 %v754
      %v759 = vunpack.c.l.b16 %v755
      %v760 = vpack.c.b16 %v759, %v758
      %v761 = vrot.slane %v760, 2
      %v763 = vsel %vm288, %v750, 0
      %v766 = vsel %vm288, %v751, 0
      %v769 = vsel %vm288, %v752, 0
      %v772 = vsel %vm288, %v753, 0
      %v775 = vsel %vm301, %v761, 0
      %777 = vmatpush.bf16.msra.mxu0 0
      %778 = vmatpush.bf16.msra.mxu0 0
      %779 = vmatpush.bf16.msra.mxu0 0
      %780 = vmatpush.bf16.msra.mxu0 0
      %781 = vmatpush.bf16.msra.mxu0 0
      %782 = vmatpush.bf16.msra.mxu0 0
      %783 = vmatpush.bf16.msra.mxu0 0
      %784 = vmatpush.bf16.msra.mxu0 %v775
      %785 = vmatmul.bf16.gmra.mxu0 %v763
      %v786 = vpop.f32.mrf.mxu0
      %v787 = vadd.f32 0.0, %v786
      %v788 = vpop.f32.mrf.mxu0
      %v789 = vadd.f32 0.0, %v788
      %790 = vmatmul.bf16.gmra.mxu0 %v766
      %v791 = vpop.f32.mrf.mxu0
      %v792 = vadd.f32 0.0, %v791
      %v793 = vpop.f32.mrf.mxu0
      %v794 = vadd.f32 0.0, %v793
      %795 = vmatmul.bf16.gmra.mxu0 %v769
      %v796 = vpop.f32.mrf.mxu0
      %v797 = vadd.f32 0.0, %v796
      %v798 = vpop.f32.mrf.mxu0
      %v799 = vadd.f32 0.0, %v798
      %800 = vmatmul.bf16.gmra.mxu0 %v772
      %v801 = vpop.f32.mrf.mxu0
      %v802 = vadd.f32 0.0, %v801
      %v803 = vpop.f32.mrf.mxu0
      %v804 = vadd.f32 0.0, %v803
      %805 = vdwg.mxu0
      %v806 = vadd.f32 %v734, %v787
      %v807 = vadd.f32 %v735, %v789
      %v808 = vadd.f32 %v736, %v792
      %v809 = vadd.f32 %v737, %v794
      %v810 = vadd.f32 %v738, %v797
      %v811 = vadd.f32 %v739, %v799
      %v812 = vadd.f32 %v740, %v802
      %v813 = vadd.f32 %v741, %v804
      %v814 = vld [vmem:[%s670 + $0x2] sm:$0xff]
      %v815 = vld [vmem:[%s670 + $0x12] sm:$0xff]
      %v816 = vld [vmem:[%s670 + $0x22] sm:$0xff]
      %v817 = vld [vmem:[%s670 + $0x32] sm:$0xff]
      %v818 = vld [vmem:[%s670 + $0x42] sm:$0xff]
      %v819 = vld [vmem:[%s670 + $0x52] sm:$0xff]
      %v820 = vld [vmem:[%s670 + $0x62] sm:$0xff]
      %v821 = vld [vmem:[%s670 + $0x72] sm:$0xff]
      %v822 = vpack.c.bf16 %v815, %v814
      %v823 = vpack.c.bf16 %v817, %v816
      %v824 = vpack.c.bf16 %v819, %v818
      %v825 = vpack.c.bf16 %v821, %v820
      %v826 = vld [vmem:[%s237 + $0x30] sm:$0xf]
      %v827 = vld [vmem:[%s237 + $0x34] sm:$0x3]
      %v830 = vunpack.c.l.b16 %v826
      %v831 = vunpack.c.l.b16 %v827
      %v832 = vpack.c.b16 %v831, %v830
      %v834 = vsel %vm288, %v822, 0
      %v837 = vsel %vm288, %v823, 0
      %v840 = vsel %vm288, %v824, 0
      %v843 = vsel %vm288, %v825, 0
      %v846 = vsel %vm301, %v832, 0
      %848 = vmatpush.bf16.msra.mxu0 0
      %849 = vmatpush.bf16.msra.mxu0 0
      %850 = vmatpush.bf16.msra.mxu0 0
      %851 = vmatpush.bf16.msra.mxu0 0
      %852 = vmatpush.bf16.msra.mxu0 0
      %853 = vmatpush.bf16.msra.mxu0 0
      %854 = vmatpush.bf16.msra.mxu0 0
      %855 = vmatpush.bf16.msra.mxu0 %v846
      %856 = vmatmul.bf16.gmra.mxu0 %v834
      %v857 = vpop.f32.mrf.mxu0
      %v858 = vadd.f32 0.0, %v857
      %v859 = vpop.f32.mrf.mxu0
      %v860 = vadd.f32 0.0, %v859
      %861 = vmatmul.bf16.gmra.mxu0 %v837
      %v862 = vpop.f32.mrf.mxu0
      %v863 = vadd.f32 0.0, %v862
      %v864 = vpop.f32.mrf.mxu0
      %v865 = vadd.f32 0.0, %v864
      %866 = vmatmul.bf16.gmra.mxu0 %v840
      %v867 = vpop.f32.mrf.mxu0
      %v868 = vadd.f32 0.0, %v867
      %v869 = vpop.f32.mrf.mxu0
      %v870 = vadd.f32 0.0, %v869
      %871 = vmatmul.bf16.gmra.mxu0 %v843
      %v872 = vpop.f32.mrf.mxu0
      %v873 = vadd.f32 0.0, %v872
      %v874 = vpop.f32.mrf.mxu0
      %v875 = vadd.f32 0.0, %v874
      %876 = vdwg.mxu0
      %v877 = vadd.f32 %v806, %v858
      %v878 = vadd.f32 %v807, %v860
      %v879 = vadd.f32 %v808, %v863
      %v880 = vadd.f32 %v809, %v865
      %v881 = vadd.f32 %v810, %v868
      %v882 = vadd.f32 %v811, %v870
      %v883 = vadd.f32 %v812, %v873
      %v884 = vadd.f32 %v813, %v875
      %v885 = vld [vmem:[%s240] sm:$0x1]
      %v887 = vperm.slane %v885, 0
      %v889 = vadd.f32 %v877, %v887
      %v890 = vadd.f32 %v878, %v887
      %v891 = vadd.f32 %v879, %v887
      %v892 = vadd.f32 %v880, %v887
      %v893 = vadd.f32 %v881, %v887
      %v894 = vadd.f32 %v882, %v887
      %v895 = vadd.f32 %v883, %v887
      %v896 = vadd.f32 %v884, %v887
      %vm897 = vcmask 261120
      %898 = vst.msk [vmem:[%s252] sm:$0xff] %vm897, %v889
      %899 = vst.msk [vmem:[%s252 + $0x8] sm:$0xff] %vm897, %v890
      %900 = vst.msk [vmem:[%s252 + $0x10] sm:$0xff] %vm897, %v891
      %901 = vst.msk [vmem:[%s252 + $0x18] sm:$0xff] %vm897, %v892
      %902 = vst.msk [vmem:[%s252 + $0x20] sm:$0xff] %vm897, %v893
      %903 = vst.msk [vmem:[%s252 + $0x28] sm:$0xff] %vm897, %v894
      %904 = vst.msk [vmem:[%s252 + $0x30] sm:$0xff] %vm897, %v895
      %905 = vst.msk [vmem:[%s252 + $0x38] sm:$0xff] %vm897, %v896
      %p906 = scmp.lt.s32.totalorder %s20, 1
      %s907 = scalar_select %p906, %s20, 1
      %p908 = scmp.lt.s32.totalorder %s21, 7
      %s909 = scalar_select %p908, %s21, 7
      %p910 = scmp.lt.s32.totalorder %s19, 0
      %s911 = scalar_select %p910, %s19, 0
      %s912 = smul.addr %s909, 8
      %s913 = sadd.s32 %s911, %s912
      %s914 = smul.addr %s907, 64
      %s915 = sadd.s32 %s913, %s914
      %s916 = smul.addr %s915, 8
      %s917 = scalar_lea.vmem %s3, %s916
      // Predicated region
      $region33: #{upsample_conv_transpose3d.1} parent=31 // pred_check
        %p918 = pneg %p135
      $region34: #{upsample_conv_transpose3d.1} parent=31 // pred_check_branch
        %920 = sbr.rel (%p918) target = $region36
      $region35: #{upsample_conv_transpose3d.1} parent=31 // pred_region
        _
      $region36: #{upsample_conv_transpose3d.1} parent=31 // pred_fallthru
        _
    $region32: #{upsample_conv_transpose3d.1} parent=5 // pred_fallthru
      _
    %p921 = scmp.le.s32.totalorder 2, %s9
    // Predicated region
    $region37: #{upsample_conv_transpose3d.1} parent=5 // pred_check
      %p922 = pneg %p921
    $region38: #{upsample_conv_transpose3d.1} parent=5 // pred_check_branch
      %924 = sbr.rel (%p922) target = $region40
    $region39: #{upsample_conv_transpose3d.1} parent=5 // pred_region
      %s925 = ssub.s32 %s9, 2
      // Predicated region
      $region41: #{upsample_conv_transpose3d.1} parent=39 // pred_check
        %p926 = pneg %p141
      $region42: #{upsample_conv_transpose3d.1} parent=39 // pred_check_branch
        %928 = sbr.rel (%p926) target = $region44
      $region43: #{upsample_conv_transpose3d.1} parent=39 // pred_region
        %p929 = scmp.lt.s32.totalorder %s23, 1
        %s930 = scalar_select %p929, %s23, 1
        %p931 = scmp.lt.s32.totalorder %s24, 7
        %s932 = scalar_select %p931, %s24, 7
        %p933 = scmp.lt.s32.totalorder %s22, 0
        %s934 = scalar_select %p933, %s22, 0
        %s935 = smul.addr %s932, 8
        %s936 = sadd.s32 %s934, %s935
        %s937 = smul.addr %s930, 64
        %s938 = sadd.s32 %s936, %s937
        %s939 = smul.addr %s938, 8
        %s940 = scalar_lea.vmem %s3, %s939
      $region44: #{upsample_conv_transpose3d.1} parent=39 // pred_fallthru
        _
    $region40: #{upsample_conv_transpose3d.1} parent=5 // pred_fallthru
      _
  $region6: #{upsample_conv_transpose3d.1} parent=0 // loop_footer
    %s13 = sadd.s32 1, %s9
  $region7: #{upsample_conv_transpose3d.1} parent=0 // loop_footer_branch
    %8 = sbr.rel target = $region3
  $region8: #{upsample_conv_transpose3d.1} parent=0 // loop_exit
    _

</llo_original>
